<compile_context>
chip_gen: v7x
topology: tpu7x:2x2x1
jax: 0.10.0
libtpu: 0.0.40
codegen_flags: <defaults>
</compile_context>

<pallas_src>
import math
from functools import partial

import jax
import jax.numpy as jnp
from jax.experimental import pallas as pl
from jax.experimental.pallas import tpu as pltpu


def _round_up(x, m):
    return (x + m - 1) // m * m


def _vmem_budget_bytes():
    """75% of physical VMEM (v5e/v6e: ~96 MiB, v7x: ~48 MiB)."""
    try:
        cap = pltpu.get_tpu_info().vmem_capacity_bytes
    except Exception:
        cap = 64 * 2 ** 20
    return int(cap * 3 // 4)


# ----------------------------- pass 1 kernel --------------------------------
def _conv_relu_stats_kernel(x_ref, w_ref, b_ref, y_ref, st_ref, *scratch,
                            T, T_out, K, dilation, pad, cin_p, im2col):
    """x_ref : (1, T, Cin_p)      w_ref : (K*Cin_p, bCout)   b_ref : (1, bCout)
       y_ref : (1, bCout, T_out)  (stored transposed, NCT)
       st_ref: (1, 2, bCout)      [per-channel sum, sum_sq]
       scratch[0]: (off + T + pad, Cin_p) reflect-padded VMEM buffer."""
    if pad > 0:
        xp = scratch[0]
        off = _round_up(pad, 8)                        # sublane-aligned body offset
        xp[off:off + T, :] = x_ref[0]                  # body copied exactly once
        for i in range(1, pad + 1):                    # tiny halo fill (2*pad rows)
            xp[off - i:off - i + 1, :] = x_ref[0, i:i + 1, :]                # left
            xp[off + T - 1 + i:off + T + i, :] = x_ref[0, T - 1 - i:T - i, :]  # right

        def tap(k):                                    # static slices of the ref
            s = off - pad + k * dilation
            return xp[s:s + T_out, :]
    else:
        def tap(k):
            return x_ref[0, k * dilation:k * dilation + T_out, :]

    if im2col and K > 1:
        # Cin_p == 128 only: concat taps on lanes so the MXU contraction depth
        # becomes K*128 (fills the 256-deep MXU on v6e/v7x); temp stays small.
        xcat = jnp.concatenate([tap(k) for k in range(K)], axis=-1)
        acc = jnp.dot(xcat, w_ref[...], preferred_element_type=jnp.float32)
    else:
        # General path: K accumulating matmuls of depth Cin_p each.
        # No im2col temp, no per-tap VPU copies — identical MXU FLOPs.
        acc = jnp.dot(tap(0), w_ref[0:cin_p, :],
                      preferred_element_type=jnp.float32)
        for k in range(1, K):
            acc = acc + jnp.dot(tap(k), w_ref[k * cin_p:(k + 1) * cin_p, :],
                                preferred_element_type=jnp.float32)

    y = jnp.maximum(acc + b_ref[...], 0.0)             # conv bias + ReLU, f32
    st_ref[0] = jnp.concatenate(
        [jnp.sum(y, axis=0, keepdims=True),
         jnp.sum(y * y, axis=0, keepdims=True)], axis=0)          # (2, bCout)
    # Store already transposed to NCT; the XLU transpose overlaps MXU work and
    # removes a full-tensor transpose pass from the wrapper.
    y_ref[0] = jnp.transpose(y, (1, 0)).astype(y_ref.dtype)


# ----------------------------- pass 2 kernel --------------------------------
def _bn_apply_kernel(y_ref, sc_ref, sh_ref, o_ref):
    """y_ref / o_ref: (1, bCout, T_out)   sc_ref / sh_ref: (bCout, 1)"""
    yv = y_ref[0].astype(jnp.float32)
    o_ref[0] = (yv * sc_ref[...] + sh_ref[...]).astype(o_ref.dtype)


# -------------------------------- wrapper -----------------------------------
def _tdnn_block_impl(x_nct, weight, bias, gamma, beta, *, dilation=1, eps=1e-5):
    """x_nct: (B, Cin, T).  weight: (Cout, Cin, K).  bias/gamma/beta: (Cout,).
       Returns (B, Cout, T_out) — identical layout to the PyTorch module."""
    B, Cin, T = x_nct.shape
    Cout, Cin_w, K = weight.shape
    assert Cin_w == Cin, "grouped conv (groups != 1) not supported"
    pad = dilation * (K - 1) // 2                     # SpeechBrain 'same' padding
    T_out = T + 2 * pad - dilation * (K - 1)
    assert T > pad, "sequence too short for reflect padding"

    dt = x_nct.dtype
    itemsize = jnp.dtype(dt).itemsize
    Cin_p = _round_up(Cin, 128)
    Cout_p = _round_up(Cout, 128)
    im2col = (Cin_p == 128)

    budget = _vmem_budget_bytes()

    def est_vmem(bc):                                 # pass-1 VMEM estimate
        e = itemsize * (2 * T * Cin_p                 # x tile (double-buffered)
                        + 2 * K * Cin_p * bc          # weight tile (double-buffered)
                        + 2 * bc * T_out              # y tile (double-buffered)
                        + (T + 2 * pad + 8) * Cin_p)  # reflect-pad scratch
        e += 4 * 2 * T_out * bc                       # fp32 acc + transposed temp
        if im2col and K > 1:
            e += itemsize * T_out * K * Cin_p         # im2col temp (Cin_p==128 only)
        return e

    cands = [c for c in (512, 384, 256, 128) if Cout_p % c == 0]
    bCout = cands[-1]
    for c in cands:                                   # largest block that fits
        if est_vmem(c) * 5 // 4 <= budget:
            bCout = c
            break
    n_cblk = Cout_p // bCout

    # Layout glue (fused by XLA under jit): channels-last, lane-padded input.
    x_btc = jnp.pad(jnp.transpose(x_nct, (0, 2, 1)),
                    ((0, 0), (0, 0), (0, Cin_p - Cin)))            # (B, T, Cin_p)
    w2 = jnp.pad(jnp.transpose(weight, (2, 1, 0)),                 # (K, Cin, Cout)
                 ((0, 0), (0, Cin_p - Cin), (0, Cout_p - Cout)))
    w2 = w2.reshape(K * Cin_p, Cout_p).astype(dt)                  # stacked taps
    b2 = jnp.pad(bias, (0, Cout_p - Cout)).astype(jnp.float32).reshape(1, Cout_p)

    # Grid order: put the operand whose re-streaming would cost more on the
    # OUTER axis so its block index is invariant over the inner loop.
    w_total = K * Cin_p * Cout_p * itemsize
    x_total = B * T * Cin_p * itemsize
    b_outer = (B - 1) * w_total <= (n_cblk - 1) * x_total
    if b_outer:
        grid = (B, n_cblk)
        x_map = lambda b, c: (b, 0, 0)
        w_map = lambda b, c: (0, c)
        v_map = lambda b, c: (0, c)
        y_map = lambda b, c: (b, c, 0)
        s_map = lambda b, c: (b, 0, c)
        cv_map = lambda b, c: (c, 0)
    else:
        grid = (n_cblk, B)
        x_map = lambda c, b: (b, 0, 0)
        w_map = lambda c, b: (0, c)
        v_map = lambda c, b: (0, c)
        y_map = lambda c, b: (b, c, 0)
        s_map = lambda c, b: (b, 0, c)
        cv_map = lambda c, b: (c, 0)

    # ---- pass 1: conv + bias + ReLU + per-tile BN partial stats (NCT y) ----
    kern1 = partial(_conv_relu_stats_kernel, T=T, T_out=T_out, K=K,
                    dilation=dilation, pad=pad, cin_p=Cin_p, im2col=im2col)
    scratch1 = ([pltpu.VMEM((_round_up(pad, 8) + T + pad, Cin_p), dt)]
                if pad > 0 else [])
    y, stats = pl.pallas_call(
        kern1,
        out_shape=(jax.ShapeDtypeStruct((B, Cout_p, T_out), dt),
                   jax.ShapeDtypeStruct((B, 2, Cout_p), jnp.float32)),
        grid=grid,
        in_specs=[pl.BlockSpec((1, T, Cin_p), x_map),
                  pl.BlockSpec((K * Cin_p, bCout), w_map),
                  pl.BlockSpec((1, bCout), v_map)],
        out_specs=(pl.BlockSpec((1, bCout, T_out), y_map),
                   pl.BlockSpec((1, 2, bCout), s_map)),
        scratch_shapes=scratch1,
        compiler_params=pltpu.CompilerParams(
            dimension_semantics=("parallel", "parallel"),
            vmem_limit_bytes=budget),
    )(x_btc, w2, b2)

    # ---- tiny XLA glue: reduce partial stats, fold BN into scale/shift ----
    s = jnp.sum(stats, axis=0)                         # (2, Cout_p)
    count = float(B * T_out)
    mean = s[0] / count
    var = jnp.maximum(s[1] / count - mean * mean, 0.0)  # biased (training BN)
    g_p = jnp.pad(gamma, (0, Cout_p - Cout)).astype(jnp.float32)
    be_p = jnp.pad(beta, (0, Cout_p - Cout)).astype(jnp.float32)
    scale = g_p * jax.lax.rsqrt(var + eps)
    shift = be_p - mean * scale
    scale = scale.reshape(Cout_p, 1)                   # per-channel column vectors
    shift = shift.reshape(Cout_p, 1)

    # ---- pass 2: y * scale + shift in NCT, aliased in place over y ----
    out_bct = pl.pallas_call(
        _bn_apply_kernel,
        out_shape=jax.ShapeDtypeStruct((B, Cout_p, T_out), dt),
        grid=grid,
        in_specs=[pl.BlockSpec((1, bCout, T_out), y_map),
                  pl.BlockSpec((bCout, 1), cv_map),
                  pl.BlockSpec((bCout, 1), cv_map)],
        out_specs=pl.BlockSpec((1, bCout, T_out), y_map),
        input_output_aliases={0: 0},
        compiler_params=pltpu.CompilerParams(
            dimension_semantics=("parallel", "parallel"),
            vmem_limit_bytes=budget),
    )(y, scale, shift)

    return out_bct[:, :Cout, :]                        # (B, Cout, T_out), NCT


tdnn_block = jax.jit(_tdnn_block_impl, static_argnames=("dilation", "eps"))


# ------------------------------ pure-JAX reference --------------------------
def _reference(x_nct, weight, bias, gamma, beta, *, dilation=1, eps=1e-5):
    B, Cin, T = x_nct.shape
    Cout, _, K = weight.shape
    pad = dilation * (K - 1) // 2
    xp = jnp.pad(x_nct, ((0, 0), (0, 0), (pad, pad)), mode="reflect")
    y = jax.lax.conv_general_dilated(
        xp, weight, window_strides=(1,), padding="VALID",
        rhs_dilation=(dilation,),
        dimension_numbers=("NCH", "OIH", "NCH"))
    y = y + bias[None, :, None]
    y = jnp.maximum(y, 0.0)
    mean = jnp.mean(y, axis=(0, 2), keepdims=True)
    var = jnp.mean((y - mean) ** 2, axis=(0, 2), keepdims=True)
    yhat = (y - mean) * jax.lax.rsqrt(var + eps)
    return yhat * gamma[None, :, None] + beta[None, :, None]


if __name__ == "__main__":
    def run_case(B, Cin, Cout, T, K, dilation, salt, tol=2e-4):
        key = jax.random.fold_in(jax.random.PRNGKey(0), salt)
        kx, kw, kb, kg, kbe = jax.random.split(key, 5)
        x = jax.random.normal(kx, (B, Cin, T), dtype=jnp.float32)
        fan_in = Cin * K
        bound = 1.0 / math.sqrt(fan_in)
        weight = jax.random.uniform(kw, (Cout, Cin, K), jnp.float32, -bound, bound)
        bias = jax.random.uniform(kb, (Cout,), jnp.float32, -bound, bound)
        gamma = 1.0 + 0.1 * jax.random.normal(kg, (Cout,), dtype=jnp.float32)
        beta = 0.1 * jax.random.normal(kbe, (Cout,), dtype=jnp.float32)

        out = tdnn_block(x, weight, bias, gamma, beta, dilation=dilation)
        out = jax.block_until_ready(out)
        ref = _reference(x, weight, bias, gamma, beta, dilation=dilation)

        pad = dilation * (K - 1) // 2
        T_out = T + 2 * pad - dilation * (K - 1)
        assert out.shape == (B, Cout, T_out), (out.shape, (B, Cout, T_out))
        err = jnp.max(jnp.abs(out - ref))
        assert jnp.allclose(out, ref, atol=tol, rtol=tol), \
            f"mismatch: max abs err {err}"

    run_case(B=2, Cin=8, Cout=8, T=16, K=3, dilation=1, salt=0)    # im2col path
    run_case(B=2, Cin=16, Cout=24, T=24, K=5, dilation=2, salt=1)  # dilated, K=5
    run_case(B=2, Cin=256, Cout=8, T=16, K=3, dilation=1, salt=2,
             tol=1e-3)                                             # K-matmul path
    print("KERNEL_OK")
</pallas_src>

<mosaic_0001>
module attributes {stable_mosaic.version = 11 : i64} {
  func.func @_conv_relu_stats_kernel(%arg0: i32, %arg1: i32, %arg2: memref<1x16x128xf32, #tpu.memory_space<vmem>>, %arg3: memref<384x128xf32, #tpu.memory_space<vmem>>, %arg4: memref<1x128xf32, #tpu.memory_space<vmem>>, %arg5: memref<1x128x16xf32, #tpu.memory_space<vmem>>, %arg6: memref<1x2x128xf32, #tpu.memory_space<vmem>>, %arg7: memref<25x128xf32, #tpu.memory_space<vmem>>) attributes {dimension_semantics = [#tpu.dimension_semantics<parallel>, #tpu.dimension_semantics<parallel>], iteration_bounds = array<i64: 1, 2>, scalar_prefetch = 0 : i64, scratch_operands = 1 : i64, tpu.core_type = #tpu.core_type<tc>, window_params = [{transform_indices = @transform_0, window_bounds = array<i64: 1, 16, 128>}, {transform_indices = @transform_1, window_bounds = array<i64: 384, 128>}, {transform_indices = @transform_2, window_bounds = array<i64: 1, 128>}, {transform_indices = @transform_3, window_bounds = array<i64: 1, 128, 16>}, {transform_indices = @transform_4, window_bounds = array<i64: 1, 2, 128>}]} {
    %c0 = arith.constant 0 : index
    %c0_0 = arith.constant 0 : index
    %c0_1 = arith.constant 0 : index
    %0 = vector.load %arg2[%c0, %c0_0, %c0_1] : memref<1x16x128xf32, #tpu.memory_space<vmem>>, vector<1x16x128xf32>
    %1 = vector.shape_cast %0 : vector<1x16x128xf32> to vector<16x128xf32>
    %c8 = arith.constant 8 : index
    %c0_2 = arith.constant 0 : index
    %2 = vector.load %arg7[%c8, %c0_2] : memref<25x128xf32, #tpu.memory_space<vmem>>, vector<16x128xf32>
    tpu.vector_store %arg7[%c8, %c0_2], %1 {strides = array<i32>} : memref<25x128xf32, #tpu.memory_space<vmem>>, vector<16x128xf32>,
    %c0_3 = arith.constant 0 : index
    %c1 = arith.constant 1 : index
    %c0_4 = arith.constant 0 : index
    %3 = vector.load %arg2[%c0_3, %c1, %c0_4] : memref<1x16x128xf32, #tpu.memory_space<vmem>>, vector<1x1x128xf32>
    %4 = vector.shape_cast %3 : vector<1x1x128xf32> to vector<1x128xf32>
    %c7 = arith.constant 7 : index
    %c0_5 = arith.constant 0 : index
    %5 = vector.load %arg7[%c7, %c0_5] : memref<25x128xf32, #tpu.memory_space<vmem>>, vector<1x128xf32>
    tpu.vector_store %arg7[%c7, %c0_5], %4 {strides = array<i32>} : memref<25x128xf32, #tpu.memory_space<vmem>>, vector<1x128xf32>,
    %c0_6 = arith.constant 0 : index
    %c14 = arith.constant 14 : index
    %c0_7 = arith.constant 0 : index
    %6 = vector.load %arg2[%c0_6, %c14, %c0_7] : memref<1x16x128xf32, #tpu.memory_space<vmem>>, vector<1x1x128xf32>
    %7 = vector.shape_cast %6 : vector<1x1x128xf32> to vector<1x128xf32>
    %c24 = arith.constant 24 : index
    %c0_8 = arith.constant 0 : index
    %8 = vector.load %arg7[%c24, %c0_8] : memref<25x128xf32, #tpu.memory_space<vmem>>, vector<1x128xf32>
    tpu.vector_store %arg7[%c24, %c0_8], %7 {strides = array<i32>} : memref<25x128xf32, #tpu.memory_space<vmem>>, vector<1x128xf32>,
    %c7_9 = arith.constant 7 : index
    %c0_10 = arith.constant 0 : index
    %9 = vector.load %arg7[%c7_9, %c0_10] : memref<25x128xf32, #tpu.memory_space<vmem>>, vector<16x128xf32>
    %c8_11 = arith.constant 8 : index
    %c0_12 = arith.constant 0 : index
    %10 = vector.load %arg7[%c8_11, %c0_12] : memref<25x128xf32, #tpu.memory_space<vmem>>, vector<16x128xf32>
    %c9 = arith.constant 9 : index
    %c0_13 = arith.constant 0 : index
    %11 = vector.load %arg7[%c9, %c0_13] : memref<25x128xf32, #tpu.memory_space<vmem>>, vector<16x128xf32>
    %12 = tpu.concatenate %9, %10, %11 in 1 : vector<16x128xf32>, vector<16x128xf32>, vector<16x128xf32> -> vector<16x384xf32>
    %c0_14 = arith.constant 0 : index
    %c0_15 = arith.constant 0 : index
    %13 = vector.load %arg3[%c0_14, %c0_15] : memref<384x128xf32, #tpu.memory_space<vmem>>, vector<384x128xf32>
    %cst = arith.constant dense<0.000000e+00> : vector<16x128xf32>
    %14 = tpu.matmul %12, %13, %cst {dimension_numbers = #tpu.dot_dimension_numbers<[1], [0], [0], [1], [0, 0, 1, 1], [], []>} : vector<16x384xf32>, vector<384x128xf32>, vector<16x128xf32> -> vector<16x128xf32>
    %c0_16 = arith.constant 0 : index
    %c0_17 = arith.constant 0 : index
    %15 = vector.load %arg4[%c0_16, %c0_17] : memref<1x128xf32, #tpu.memory_space<vmem>>, vector<1x128xf32>
    %16 = vector.broadcast %15 : vector<1x128xf32> to vector<16x128xf32>
    %17 = arith.addf %14, %16 : vector<16x128xf32>
    %cst_18 = arith.constant 0.000000e+00 : f32
    %18 = vector.broadcast %cst_18 : f32 to vector<16x128xf32>
    %19 = arith.maximumf %17, %18 : vector<16x128xf32>
    %cst_19 = arith.constant dense<0.000000e+00> : vector<128xf32>
    %20 = vector.multi_reduction <add>, %19, %cst_19 [0] : vector<16x128xf32> to vector<128xf32>
    %21 = vector.shape_cast %20 : vector<128xf32> to vector<1x128xf32>
    %22 = arith.mulf %19, %19 : vector<16x128xf32>
    %cst_20 = arith.constant dense<0.000000e+00> : vector<128xf32>
    %23 = vector.multi_reduction <add>, %22, %cst_20 [0] : vector<16x128xf32> to vector<128xf32>
    %24 = vector.shape_cast %23 : vector<128xf32> to vector<1x128xf32>
    %25 = tpu.concatenate %21, %24 in 0 : vector<1x128xf32>, vector<1x128xf32> -> vector<2x128xf32>
    %c0_21 = arith.constant 0 : index
    %c0_22 = arith.constant 0 : index
    %c0_23 = arith.constant 0 : index
    %26 = vector.load %arg6[%c0_21, %c0_22, %c0_23] : memref<1x2x128xf32, #tpu.memory_space<vmem>>, vector<1x2x128xf32>
    %27 = vector.shape_cast %26 : vector<1x2x128xf32> to vector<2x128xf32>
    %28 = vector.shape_cast %25 : vector<2x128xf32> to vector<1x2x128xf32>
    tpu.vector_store %arg6[%c0_21, %c0_22, %c0_23], %28 {strides = array<i32>} : memref<1x2x128xf32, #tpu.memory_space<vmem>>, vector<1x2x128xf32>,
    %29 = tpu.transpose %19, [1, 0] : vector<16x128xf32> -> vector<128x16xf32>
    %c0_24 = arith.constant 0 : index
    %c0_25 = arith.constant 0 : index
    %c0_26 = arith.constant 0 : index
    %30 = vector.load %arg5[%c0_24, %c0_25, %c0_26] : memref<1x128x16xf32, #tpu.memory_space<vmem>>, vector<1x128x16xf32>
    %31 = vector.shape_cast %30 : vector<1x128x16xf32> to vector<128x16xf32>
    %32 = vector.shape_cast %29 : vector<128x16xf32> to vector<1x128x16xf32>
    tpu.vector_store %arg5[%c0_24, %c0_25, %c0_26], %32 {strides = array<i32>} : memref<1x128x16xf32, #tpu.memory_space<vmem>>, vector<1x128x16xf32>,
    return
  }
  func.func @transform_0(%arg0: i32, %arg1: i32) -> (i32, i32, i32) {
    %c0_i32 = arith.constant 0 : i32
    %c0_i32_0 = arith.constant 0 : i32
    %c0_i32_1 = arith.constant 0 : i32
    return %arg1, %c0_i32, %c0_i32_0 : i32, i32, i32
  }
  func.func @transform_1(%arg0: i32, %arg1: i32) -> (i32, i32) {
    %c0_i32 = arith.constant 0 : i32
    %c0_i32_0 = arith.constant 0 : i32
    return %c0_i32, %arg0 : i32, i32
  }
  func.func @transform_2(%arg0: i32, %arg1: i32) -> (i32, i32) {
    %c0_i32 = arith.constant 0 : i32
    %c0_i32_0 = arith.constant 0 : i32
    return %c0_i32, %arg0 : i32, i32
  }
  func.func @transform_3(%arg0: i32, %arg1: i32) -> (i32, i32, i32) {
    %c0_i32 = arith.constant 0 : i32
    %c0_i32_0 = arith.constant 0 : i32
    return %arg1, %arg0, %c0_i32 : i32, i32, i32
  }
  func.func @transform_4(%arg0: i32, %arg1: i32) -> (i32, i32, i32) {
    %c0_i32 = arith.constant 0 : i32
    %c0_i32_0 = arith.constant 0 : i32
    return %arg1, %c0_i32, %arg0 : i32, i32, i32
  }
}

module attributes {stable_mosaic.version = 11 : i64} {
  func.func @_bn_apply_kernel(%arg0: i32, %arg1: i32, %arg2: memref<1x128x16xf32, #tpu.memory_space<vmem>>, %arg3: memref<128x1xf32, #tpu.memory_space<vmem>>, %arg4: memref<128x1xf32, #tpu.memory_space<vmem>>, %arg5: memref<1x128x16xf32, #tpu.memory_space<vmem>>) attributes {dimension_semantics = [#tpu.dimension_semantics<parallel>, #tpu.dimension_semantics<parallel>], iteration_bounds = array<i64: 1, 2>, scalar_prefetch = 0 : i64, scratch_operands = 0 : i64, tpu.core_type = #tpu.core_type<tc>, window_params = [{transform_indices = @transform_0, window_bounds = array<i64: 1, 128, 16>}, {transform_indices = @transform_1, window_bounds = array<i64: 128, 1>}, {transform_indices = @transform_2, window_bounds = array<i64: 128, 1>}, {transform_indices = @transform_3, window_bounds = array<i64: 1, 128, 16>}]} {
    %c0 = arith.constant 0 : index
    %c0_0 = arith.constant 0 : index
    %c0_1 = arith.constant 0 : index
    %0 = vector.load %arg2[%c0, %c0_0, %c0_1] : memref<1x128x16xf32, #tpu.memory_space<vmem>>, vector<1x128x16xf32>
    %1 = vector.shape_cast %0 : vector<1x128x16xf32> to vector<128x16xf32>
    %c0_2 = arith.constant 0 : index
    %c0_3 = arith.constant 0 : index
    %2 = vector.load %arg3[%c0_2, %c0_3] : memref<128x1xf32, #tpu.memory_space<vmem>>, vector<128x1xf32>
    %3 = vector.broadcast %2 : vector<128x1xf32> to vector<128x16xf32>
    %4 = arith.mulf %1, %3 : vector<128x16xf32>
    %c0_4 = arith.constant 0 : index
    %c0_5 = arith.constant 0 : index
    %5 = vector.load %arg4[%c0_4, %c0_5] : memref<128x1xf32, #tpu.memory_space<vmem>>, vector<128x1xf32>
    %6 = vector.broadcast %5 : vector<128x1xf32> to vector<128x16xf32>
    %7 = arith.addf %4, %6 : vector<128x16xf32>
    %c0_6 = arith.constant 0 : index
    %c0_7 = arith.constant 0 : index
    %c0_8 = arith.constant 0 : index
    %8 = vector.load %arg5[%c0_6, %c0_7, %c0_8] : memref<1x128x16xf32, #tpu.memory_space<vmem>>, vector<1x128x16xf32>
    %9 = vector.shape_cast %8 : vector<1x128x16xf32> to vector<128x16xf32>
    %10 = vector.shape_cast %7 : vector<128x16xf32> to vector<1x128x16xf32>
    tpu.vector_store %arg5[%c0_6, %c0_7, %c0_8], %10 {strides = array<i32>} : memref<1x128x16xf32, #tpu.memory_space<vmem>>, vector<1x128x16xf32>,
    return
  }
  func.func @transform_0(%arg0: i32, %arg1: i32) -> (i32, i32, i32) {
    %c0_i32 = arith.constant 0 : i32
    %c0_i32_0 = arith.constant 0 : i32
    return %arg1, %arg0, %c0_i32 : i32, i32, i32
  }
  func.func @transform_1(%arg0: i32, %arg1: i32) -> (i32, i32) {
    %c0_i32 = arith.constant 0 : i32
    %c0_i32_0 = arith.constant 0 : i32
    return %arg0, %c0_i32 : i32, i32
  }
  func.func @transform_2(%arg0: i32, %arg1: i32) -> (i32, i32) {
    %c0_i32 = arith.constant 0 : i32
    %c0_i32_0 = arith.constant 0 : i32
    return %arg0, %c0_i32 : i32, i32
  }
  func.func @transform_3(%arg0: i32, %arg1: i32) -> (i32, i32, i32) {
    %c0_i32 = arith.constant 0 : i32
    %c0_i32_0 = arith.constant 0 : i32
    return %arg1, %arg0, %c0_i32 : i32, i32, i32
  }
}

</mosaic_0001>

<llo_original>
// kernel: _tdnn_block_impl.3
$region0: #{_tdnn_block_impl.3}
  #allocation0 [shape = 'u32[]', space=smem, size = 0x4, offset = 0x4, fixed_abs, tag = 'smem constant byte address 0x4 - core index']
  #allocation1 [shape = 'u32[144,128]{1,0:T(1,128)}', space=vmem, size = 0x12000, scoped, tag = 'internal scratch']
  %s0 = inlined_call_operand.vmem [shape: f32[2,128,16], index: 0, kind: input, shape index: {}, may-alias: {0,3}]
  %s1 = inlined_call_operand.vmem [shape: f32[128,1], index: 1, kind: input, shape index: {}]
  %s2 = inlined_call_operand.vmem [shape: f32[128,1], index: 2, kind: input, shape index: {}]
  %s3 = inlined_call_operand.vmem [shape: f32[2,128,16], index: 3, kind: output, shape index: {}, may-alias: {0,3}]
  %s4 = sld [smem:[#allocation0]]
  $region45: #{_tdnn_block_impl.3} parent=0
    _
  %s6 = ssub.s32 1, %s4
  %s7 = scalar_select 0, %s6, %s4
  loop: start=0, step=1, limit=4
  $region2: #{_tdnn_block_impl.3} parent=0 // loop_pre_header
    _
  $region3: #{_tdnn_block_impl.3} parent=0 // loop_header
    %s9 = sphi 0, %s13
    %p10 = scmp.ge.s32.totalorder %s9, 4
    %s16 = sphi 0, %s28
    %s17 = sphi 0, %s24
    %s18 = sphi 0, %s16
    %s19 = sphi 0, %s17
    %s20 = sphi 0, %s18
    %s21 = sphi 0, %s19
    %s33 = sphi 0, %s35
    %s36 = sphi 0, %s33
    %s37 = sphi 0, %s36
    %s53 = sphi 0, %s37
    %s59 = sphi 0, %s61
    %s62 = sphi 0, %s59
    %s63 = sphi 0, %s62
    %s79 = sphi 0, %s63
    %s85 = sphi 0, %s87
    %s88 = sphi 0, %s85
    %s89 = sphi 0, %s88
    %s105 = sphi 0, %s89
    %s113 = sphi 0, %s115
    %s116 = sphi 0, %s113
    %s117 = sphi 0, %s116
    %s133 = sphi 0, %s117
  $region4: #{_tdnn_block_impl.3} parent=0 // loop_header_branch
    %12 = sbr.rel (%p10) target = $region8
  $region5: #{_tdnn_block_impl.3} parent=0 // loop_body
    %s14 = ssub.s32 %s9, 1
    %s15 = ssub.s32 %s9, 2
    %s22 = sadd.s32 1, %s17
    %p23 = scmp.ge.s32.totalorder %s22, 2
    %s24 = scalar_select %p23, 0, %s22
    %s25 = sadd.s32 1, %s16
    %s26 = scalar_select %p23, %s25, %s16
    %p27 = scmp.ge.s32.totalorder %s26, 1
    %s28 = scalar_select %p27, 0, %s26
    %s29 = ssub.s32 %s17, %s24
    %s30 = ssub.s32 %s16, %s28
    %s31 = sor.u32 %s29, %s30
    %p32 = scmp.eq.s32.totalorder %s31, 0
    %s34 = sadd.s32 %s33, 1
    %s35 = scalar_select %p32, %s33, %s34
    %p38 = pneg %p32
    %p39 = scmp.eq.s32.totalorder %s9, 1
    %p40 = por %p38, %p39
    %p41 = scmp.ne.s32.totalorder %s33, %s36
    %p42 = scmp.eq.s32.totalorder %s9, 0
    %p43 = por %p41, %p42
    %p44 = scmp.ne.s32.totalorder %s33, %s36
    %p45 = scmp.eq.s32.totalorder %s14, 1
    %p46 = por %p44, %p45
    %p47 = scmp.ne.s32.totalorder %s36, %s37
    %p48 = scmp.eq.s32.totalorder %s14, 0
    %p49 = por %p47, %p48
    %p50 = scmp.ne.s32.totalorder %s36, %s37
    %p51 = scmp.eq.s32.totalorder %s15, 1
    %p52 = por %p50, %p51
    %p54 = scmp.ne.s32.totalorder %s37, %s53
    %p55 = scmp.eq.s32.totalorder %s15, 0
    %p56 = por %p54, %p55
    %s57 = ssub.s32 %s16, %s28
    %p58 = scmp.eq.s32.totalorder %s57, 0
    %s60 = sadd.s32 %s59, 1
    %s61 = scalar_select %p58, %s59, %s60
    %p64 = pneg %p58
    %p65 = scmp.eq.s32.totalorder %s9, 1
    %p66 = por %p64, %p65
    %p67 = scmp.ne.s32.totalorder %s59, %s62
    %p68 = scmp.eq.s32.totalorder %s9, 0
    %p69 = por %p67, %p68
    %p70 = scmp.ne.s32.totalorder %s59, %s62
    %p71 = scmp.eq.s32.totalorder %s14, 1
    %p72 = por %p70, %p71
    %p73 = scmp.ne.s32.totalorder %s62, %s63
    %p74 = scmp.eq.s32.totalorder %s14, 0
    %p75 = por %p73, %p74
    %p76 = scmp.ne.s32.totalorder %s62, %s63
    %p77 = scmp.eq.s32.totalorder %s15, 1
    %p78 = por %p76, %p77
    %p80 = scmp.ne.s32.totalorder %s63, %s79
    %p81 = scmp.eq.s32.totalorder %s15, 0
    %p82 = por %p80, %p81
    %s83 = ssub.s32 %s16, %s28
    %p84 = scmp.eq.s32.totalorder %s83, 0
    %s86 = sadd.s32 %s85, 1
    %s87 = scalar_select %p84, %s85, %s86
    %p90 = pneg %p84
    %p91 = scmp.eq.s32.totalorder %s9, 1
    %p92 = por %p90, %p91
    %p93 = scmp.ne.s32.totalorder %s85, %s88
    %p94 = scmp.eq.s32.totalorder %s9, 0
    %p95 = por %p93, %p94
    %p96 = scmp.ne.s32.totalorder %s85, %s88
    %p97 = scmp.eq.s32.totalorder %s14, 1
    %p98 = por %p96, %p97
    %p99 = scmp.ne.s32.totalorder %s88, %s89
    %p100 = scmp.eq.s32.totalorder %s14, 0
    %p101 = por %p99, %p100
    %p102 = scmp.ne.s32.totalorder %s88, %s89
    %p103 = scmp.eq.s32.totalorder %s15, 1
    %p104 = por %p102, %p103
    %p106 = scmp.ne.s32.totalorder %s89, %s105
    %p107 = scmp.eq.s32.totalorder %s15, 0
    %p108 = por %p106, %p107
    %s109 = ssub.s32 %s17, %s24
    %s110 = ssub.s32 %s16, %s28
    %s111 = sor.u32 %s109, %s110
    %p112 = scmp.eq.s32.totalorder %s111, 0
    %s114 = sadd.s32 %s113, 1
    %s115 = scalar_select %p112, %s113, %s114
    %p118 = pneg %p112
    %p119 = scmp.eq.s32.totalorder %s9, 1
    %p120 = por %p118, %p119
    %p121 = scmp.ne.s32.totalorder %s113, %s116
    %p122 = scmp.eq.s32.totalorder %s9, 0
    %p123 = por %p121, %p122
    %p124 = scmp.ne.s32.totalorder %s113, %s116
    %p125 = scmp.eq.s32.totalorder %s14, 1
    %p126 = por %p124, %p125
    %p127 = scmp.ne.s32.totalorder %s116, %s117
    %p128 = scmp.eq.s32.totalorder %s14, 0
    %p129 = por %p127, %p128
    %p130 = scmp.ne.s32.totalorder %s116, %s117
    %p131 = scmp.eq.s32.totalorder %s15, 1
    %p132 = por %p130, %p131
    %p134 = scmp.ne.s32.totalorder %s117, %s133
    %p135 = scmp.eq.s32.totalorder %s15, 0
    %p136 = por %p134, %p135
    %p137 = scmp.le.s32.totalorder 1, %s9
    %p138 = scmp.lt.s32.totalorder %s9, 3
    %p139 = pnand %p137, %p138
    %p140 = pneg %p139
    // Predicated region
    $region9: #{_tdnn_block_impl.3} parent=5 // pred_check
      _
    $region10: #{_tdnn_block_impl.3} parent=5 // pred_check_branch
      %142 = sbr.rel (%p139) target = $region12
    $region11: #{_tdnn_block_impl.3} parent=5 // pred_region
      %s143 = ssub.s32 %s9, 1
      // Predicated region
      $region13: #{_tdnn_block_impl.3} parent=11 // pred_check
        %p144 = pneg %p75
      $region14: #{_tdnn_block_impl.3} parent=11 // pred_check_branch
        %146 = sbr.rel (%p144) target = $region16
      $region15: #{_tdnn_block_impl.3} parent=11 // pred_region
        %s147 = smul.u32 16, %s18
        %p148 = scmp.lt.s32.totalorder %s147, 15
        %s149 = scalar_select %p148, %s147, 15
        %s150 = smul.addr %s149, 8
        %s151 = scalar_lea.vmem %s1, %s150
        %s152 = smul.u32 16, %s18
      $region16: #{_tdnn_block_impl.3} parent=11 // pred_fallthru
        _
      // Predicated region
      $region17: #{_tdnn_block_impl.3} parent=11 // pred_check
        %p153 = pneg %p101
      $region18: #{_tdnn_block_impl.3} parent=11 // pred_check_branch
        %155 = sbr.rel (%p153) target = $region20
      $region19: #{_tdnn_block_impl.3} parent=11 // pred_region
        %s156 = smul.u32 16, %s18
        %p157 = scmp.lt.s32.totalorder %s156, 15
        %s158 = scalar_select %p157, %s156, 15
        %s159 = smul.addr %s158, 8
        %s160 = scalar_lea.vmem %s2, %s159
        %s161 = smul.u32 16, %s18
      $region20: #{_tdnn_block_impl.3} parent=11 // pred_fallthru
        _
    $region12: #{_tdnn_block_impl.3} parent=5 // pred_fallthru
      _
    %p162 = scmp.lt.s32.totalorder %s9, 2
    // Predicated region
    $region21: #{_tdnn_block_impl.3} parent=5 // pred_check
      %p163 = pneg %p162
    $region22: #{_tdnn_block_impl.3} parent=5 // pred_check_branch
      %165 = sbr.rel (%p163) target = $region24
    $region23: #{_tdnn_block_impl.3} parent=5 // pred_region
      // Predicated region
      $region25: #{_tdnn_block_impl.3} parent=23 // pred_check
        %p166 = pneg %p43
      $region26: #{_tdnn_block_impl.3} parent=23 // pred_check_branch
        %168 = sbr.rel (%p166) target = $region28
      $region27: #{_tdnn_block_impl.3} parent=23 // pred_region
        %s169 = smul.u32 16, %s16
        %p170 = scmp.lt.s32.totalorder %s17, 1
        %s171 = scalar_select %p170, %s17, 1
        %p172 = scmp.lt.s32.totalorder %s169, 15
        %s173 = scalar_select %p172, %s169, 15
        %s174 = smul.addr %s171, 16
        %s175 = sadd.s32 %s173, %s174
        %s176 = smul.addr %s175, 8
        %s177 = scalar_lea.vmem %s0, %s176
        %s178 = smul.u32 16, %s16
      $region28: #{_tdnn_block_impl.3} parent=23 // pred_fallthru
        _
    $region24: #{_tdnn_block_impl.3} parent=5 // pred_fallthru
      _
    %p179 = scmp.le.s32.totalorder 1, %s9
    %p180 = scmp.lt.s32.totalorder %s9, 3
    %p181 = pnand %p179, %p180
    %p182 = pneg %p181
    // Predicated region
    $region29: #{_tdnn_block_impl.3} parent=5 // pred_check
      _
    $region30: #{_tdnn_block_impl.3} parent=5 // pred_check_branch
      %184 = sbr.rel (%p181) target = $region32
    $region31: #{_tdnn_block_impl.3} parent=5 // pred_region
      %s185 = ssub.s32 %s9, 1
      %s186 = smul.u32 16, %s18
      %p187 = scmp.lt.s32.totalorder %s19, 1
      %s188 = scalar_select %p187, %s19, 1
      %p189 = scmp.lt.s32.totalorder %s186, 15
      %s190 = scalar_select %p189, %s186, 15
      %s191 = smul.addr %s188, 16
      %s192 = sadd.s32 %s190, %s191
      %s193 = smul.addr %s192, 8
      %s194 = scalar_lea.vmem %s0, %s193
      %p195 = pneg %p49
      %p196 = pneg %p46
      %s197 = smul.u32 16, %s18
      %p198 = scmp.lt.s32.totalorder %s197, 15
      %s199 = scalar_select %p198, %s197, 15
      %s200 = smul.addr %s199, 8
      %s201 = scalar_lea.vmem %s1, %s200
      %p202 = pneg %p75
      %p203 = pneg %p72
      %s204 = smul.u32 16, %s18
      %p205 = scmp.lt.s32.totalorder %s204, 15
      %s206 = scalar_select %p205, %s204, 15
      %s207 = smul.addr %s206, 8
      %s208 = scalar_lea.vmem %s2, %s207
      %p209 = pneg %p101
      %p210 = pneg %p98
      %p211 = pneg %p129
      %p212 = pneg %p126
      %s213 = smul.u32 16, %s18
      %p214 = scmp.lt.s32.totalorder %s19, 1
      %s215 = scalar_select %p214, %s19, 1
      %p216 = scmp.lt.s32.totalorder %s213, 15
      %s217 = scalar_select %p216, %s213, 15
      %s218 = smul.addr %s215, 16
      %s219 = sadd.s32 %s217, %s218
      %s220 = smul.addr %s219, 8
      %s221 = scalar_lea.vmem %s3, %s220
      %s222 = smul.u32 16, %s18
      %p223 = scmp.lt.s32.totalorder %s19, 1
      %s224 = scalar_select %p223, %s19, 1
      %p225 = scmp.lt.s32.totalorder %s222, 15
      %s226 = scalar_select %p225, %s222, 15
      %s227 = smul.addr %s224, 16
      %s228 = sadd.s32 %s226, %s227
      %s229 = smul.addr %s228, 8
      %s230 = scalar_lea.vmem %s0, %s229
      %s231 = smul.u32 16, %s18
      %s232 = smul.u32 16, %s18
      %p233 = scmp.lt.s32.totalorder %s232, 15
      %s234 = scalar_select %p233, %s232, 15
      %s235 = smul.addr %s234, 8
      %s236 = scalar_lea.vmem %s1, %s235
      %s237 = smul.u32 16, %s18
      %s238 = smul.u32 16, %s18
      %p239 = scmp.lt.s32.totalorder %s238, 15
      %s240 = scalar_select %p239, %s238, 15
      %s241 = smul.addr %s240, 8
      %s242 = scalar_lea.vmem %s2, %s241
      %s243 = smul.u32 16, %s18
      %s244 = smul.u32 16, %s18
      %p245 = scmp.lt.s32.totalorder %s19, 1
      %s246 = scalar_select %p245, %s19, 1
      %p247 = scmp.lt.s32.totalorder %s244, 15
      %s248 = scalar_select %p247, %s244, 15
      %s249 = smul.addr %s246, 16
      %s250 = sadd.s32 %s248, %s249
      %s251 = smul.addr %s250, 8
      %s252 = scalar_lea.vmem %s3, %s251
      %s253 = smul.u32 16, %s18
      %v254 = vld [vmem:[%s230] sm:$0xff]
      %v255 = vld [vmem:[%s230 + $0x8] sm:$0xff]
      %v256 = vld [vmem:[%s230 + $0x10] sm:$0xff]
      %v257 = vld [vmem:[%s230 + $0x18] sm:$0xff]
      %v258 = vld [vmem:[%s230 + $0x20] sm:$0xff]
      %v259 = vld [vmem:[%s230 + $0x28] sm:$0xff]
      %v260 = vld [vmem:[%s230 + $0x30] sm:$0xff]
      %v261 = vld [vmem:[%s230 + $0x38] sm:$0xff]
      %v262 = vld [vmem:[%s230 + $0x40] sm:$0xff]
      %v263 = vld [vmem:[%s230 + $0x48] sm:$0xff]
      %v264 = vld [vmem:[%s230 + $0x50] sm:$0xff]
      %v265 = vld [vmem:[%s230 + $0x58] sm:$0xff]
      %v266 = vld [vmem:[%s230 + $0x60] sm:$0xff]
      %v267 = vld [vmem:[%s230 + $0x68] sm:$0xff]
      %v268 = vld [vmem:[%s230 + $0x70] sm:$0xff]
      %v269 = vld [vmem:[%s230 + $0x78] sm:$0xff]
      %v270 = vld [vmem:[%s236] sm:$0xff]
      %v271 = vld [vmem:[%s236 + $0x8] sm:$0xff]
      %v272 = vld [vmem:[%s236 + $0x10] sm:$0xff]
      %v273 = vld [vmem:[%s236 + $0x18] sm:$0xff]
      %v274 = vld [vmem:[%s236 + $0x20] sm:$0xff]
      %v275 = vld [vmem:[%s236 + $0x28] sm:$0xff]
      %v276 = vld [vmem:[%s236 + $0x30] sm:$0xff]
      %v277 = vld [vmem:[%s236 + $0x38] sm:$0xff]
      %v278 = vld [vmem:[%s236 + $0x40] sm:$0xff]
      %v279 = vld [vmem:[%s236 + $0x48] sm:$0xff]
      %v280 = vld [vmem:[%s236 + $0x50] sm:$0xff]
      %v281 = vld [vmem:[%s236 + $0x58] sm:$0xff]
      %v282 = vld [vmem:[%s236 + $0x60] sm:$0xff]
      %v283 = vld [vmem:[%s236 + $0x68] sm:$0xff]
      %v284 = vld [vmem:[%s236 + $0x70] sm:$0xff]
      %v285 = vld [vmem:[%s236 + $0x78] sm:$0xff]
      %287 = vset.pattern.permute.xlu0 0
      %288 = vperm.xlu0 %287, %v270
      %v289 = vpop.permute.xlu0 %288
      %292 = vset.pattern.permute.xlu0 0
      %293 = vperm.xlu0 %292, %v271
      %v294 = vpop.permute.xlu0 %293
      %297 = vset.pattern.permute.xlu0 0
      %298 = vperm.xlu0 %297, %v272
      %v299 = vpop.permute.xlu0 %298
      %302 = vset.pattern.permute.xlu0 0
      %303 = vperm.xlu0 %302, %v273
      %v304 = vpop.permute.xlu0 %303
      %307 = vset.pattern.permute.xlu0 0
      %308 = vperm.xlu0 %307, %v274
      %v309 = vpop.permute.xlu0 %308
      %312 = vset.pattern.permute.xlu0 0
      %313 = vperm.xlu0 %312, %v275
      %v314 = vpop.permute.xlu0 %313
      %317 = vset.pattern.permute.xlu0 0
      %318 = vperm.xlu0 %317, %v276
      %v319 = vpop.permute.xlu0 %318
      %322 = vset.pattern.permute.xlu0 0
      %323 = vperm.xlu0 %322, %v277
      %v324 = vpop.permute.xlu0 %323
      %327 = vset.pattern.permute.xlu0 0
      %328 = vperm.xlu0 %327, %v278
      %v329 = vpop.permute.xlu0 %328
      %332 = vset.pattern.permute.xlu0 0
      %333 = vperm.xlu0 %332, %v279
      %v334 = vpop.permute.xlu0 %333
      %337 = vset.pattern.permute.xlu0 0
      %338 = vperm.xlu0 %337, %v280
      %v339 = vpop.permute.xlu0 %338
      %342 = vset.pattern.permute.xlu0 0
      %343 = vperm.xlu0 %342, %v281
      %v344 = vpop.permute.xlu0 %343
      %347 = vset.pattern.permute.xlu0 0
      %348 = vperm.xlu0 %347, %v282
      %v349 = vpop.permute.xlu0 %348
      %352 = vset.pattern.permute.xlu0 0
      %353 = vperm.xlu0 %352, %v283
      %v354 = vpop.permute.xlu0 %353
      %357 = vset.pattern.permute.xlu0 0
      %358 = vperm.xlu0 %357, %v284
      %v359 = vpop.permute.xlu0 %358
      %362 = vset.pattern.permute.xlu0 0
      %363 = vperm.xlu0 %362, %v285
      %v364 = vpop.permute.xlu0 %363
      %v366 = vmul.f32 %v254, %v289
      %v367 = vmul.f32 %v255, %v294
      %v368 = vmul.f32 %v256, %v299
      %v369 = vmul.f32 %v257, %v304
      %v370 = vmul.f32 %v258, %v309
      %v371 = vmul.f32 %v259, %v314
      %v372 = vmul.f32 %v260, %v319
      %v373 = vmul.f32 %v261, %v324
      %v374 = vmul.f32 %v262, %v329
      %v375 = vmul.f32 %v263, %v334
      %v376 = vmul.f32 %v264, %v339
      %v377 = vmul.f32 %v265, %v344
      %v378 = vmul.f32 %v266, %v349
      %v379 = vmul.f32 %v267, %v354
      %v380 = vmul.f32 %v268, %v359
      %v381 = vmul.f32 %v269, %v364
      %v382 = vld [vmem:[%s242] sm:$0xff]
      %v383 = vld [vmem:[%s242 + $0x8] sm:$0xff]
      %v384 = vld [vmem:[%s242 + $0x10] sm:$0xff]
      %v385 = vld [vmem:[%s242 + $0x18] sm:$0xff]
      %v386 = vld [vmem:[%s242 + $0x20] sm:$0xff]
      %v387 = vld [vmem:[%s242 + $0x28] sm:$0xff]
      %v388 = vld [vmem:[%s242 + $0x30] sm:$0xff]
      %v389 = vld [vmem:[%s242 + $0x38] sm:$0xff]
      %v390 = vld [vmem:[%s242 + $0x40] sm:$0xff]
      %v391 = vld [vmem:[%s242 + $0x48] sm:$0xff]
      %v392 = vld [vmem:[%s242 + $0x50] sm:$0xff]
      %v393 = vld [vmem:[%s242 + $0x58] sm:$0xff]
      %v394 = vld [vmem:[%s242 + $0x60] sm:$0xff]
      %v395 = vld [vmem:[%s242 + $0x68] sm:$0xff]
      %v396 = vld [vmem:[%s242 + $0x70] sm:$0xff]
      %v397 = vld [vmem:[%s242 + $0x78] sm:$0xff]
      %399 = vset.pattern.permute.xlu0 0
      %400 = vperm.xlu0 %399, %v382
      %v401 = vpop.permute.xlu0 %400
      %404 = vset.pattern.permute.xlu0 0
      %405 = vperm.xlu0 %404, %v383
      %v406 = vpop.permute.xlu0 %405
      %409 = vset.pattern.permute.xlu0 0
      %410 = vperm.xlu0 %409, %v384
      %v411 = vpop.permute.xlu0 %410
      %414 = vset.pattern.permute.xlu0 0
      %415 = vperm.xlu0 %414, %v385
      %v416 = vpop.permute.xlu0 %415
      %419 = vset.pattern.permute.xlu0 0
      %420 = vperm.xlu0 %419, %v386
      %v421 = vpop.permute.xlu0 %420
      %424 = vset.pattern.permute.xlu0 0
      %425 = vperm.xlu0 %424, %v387
      %v426 = vpop.permute.xlu0 %425
      %429 = vset.pattern.permute.xlu0 0
      %430 = vperm.xlu0 %429, %v388
      %v431 = vpop.permute.xlu0 %430
      %434 = vset.pattern.permute.xlu0 0
      %435 = vperm.xlu0 %434, %v389
      %v436 = vpop.permute.xlu0 %435
      %439 = vset.pattern.permute.xlu0 0
      %440 = vperm.xlu0 %439, %v390
      %v441 = vpop.permute.xlu0 %440
      %444 = vset.pattern.permute.xlu0 0
      %445 = vperm.xlu0 %444, %v391
      %v446 = vpop.permute.xlu0 %445
      %449 = vset.pattern.permute.xlu0 0
      %450 = vperm.xlu0 %449, %v392
      %v451 = vpop.permute.xlu0 %450
      %454 = vset.pattern.permute.xlu0 0
      %455 = vperm.xlu0 %454, %v393
      %v456 = vpop.permute.xlu0 %455
      %459 = vset.pattern.permute.xlu0 0
      %460 = vperm.xlu0 %459, %v394
      %v461 = vpop.permute.xlu0 %460
      %464 = vset.pattern.permute.xlu0 0
      %465 = vperm.xlu0 %464, %v395
      %v466 = vpop.permute.xlu0 %465
      %469 = vset.pattern.permute.xlu0 0
      %470 = vperm.xlu0 %469, %v396
      %v471 = vpop.permute.xlu0 %470
      %474 = vset.pattern.permute.xlu0 0
      %475 = vperm.xlu0 %474, %v397
      %v476 = vpop.permute.xlu0 %475
      %v478 = vadd.f32 %v366, %v401
      %v479 = vadd.f32 %v367, %v406
      %v480 = vadd.f32 %v368, %v411
      %v481 = vadd.f32 %v369, %v416
      %v482 = vadd.f32 %v370, %v421
      %v483 = vadd.f32 %v371, %v426
      %v484 = vadd.f32 %v372, %v431
      %v485 = vadd.f32 %v373, %v436
      %v486 = vadd.f32 %v374, %v441
      %v487 = vadd.f32 %v375, %v446
      %v488 = vadd.f32 %v376, %v451
      %v489 = vadd.f32 %v377, %v456
      %v490 = vadd.f32 %v378, %v461
      %v491 = vadd.f32 %v379, %v466
      %v492 = vadd.f32 %v380, %v471
      %v493 = vadd.f32 %v381, %v476
      %vm494 = vcmask 130048
      %495 = vst.msk [vmem:[%s252] sm:$0xff] %vm494, %v478
      %496 = vst.msk [vmem:[%s252 + $0x8] sm:$0xff] %vm494, %v479
      %497 = vst.msk [vmem:[%s252 + $0x10] sm:$0xff] %vm494, %v480
      %498 = vst.msk [vmem:[%s252 + $0x18] sm:$0xff] %vm494, %v481
      %499 = vst.msk [vmem:[%s252 + $0x20] sm:$0xff] %vm494, %v482
      %500 = vst.msk [vmem:[%s252 + $0x28] sm:$0xff] %vm494, %v483
      %501 = vst.msk [vmem:[%s252 + $0x30] sm:$0xff] %vm494, %v484
      %502 = vst.msk [vmem:[%s252 + $0x38] sm:$0xff] %vm494, %v485
      %503 = vst.msk [vmem:[%s252 + $0x40] sm:$0xff] %vm494, %v486
      %504 = vst.msk [vmem:[%s252 + $0x48] sm:$0xff] %vm494, %v487
      %505 = vst.msk [vmem:[%s252 + $0x50] sm:$0xff] %vm494, %v488
      %506 = vst.msk [vmem:[%s252 + $0x58] sm:$0xff] %vm494, %v489
      %507 = vst.msk [vmem:[%s252 + $0x60] sm:$0xff] %vm494, %v490
      %508 = vst.msk [vmem:[%s252 + $0x68] sm:$0xff] %vm494, %v491
      %509 = vst.msk [vmem:[%s252 + $0x70] sm:$0xff] %vm494, %v492
      %510 = vst.msk [vmem:[%s252 + $0x78] sm:$0xff] %vm494, %v493
      %s511 = smul.u32 16, %s18
      %p512 = scmp.lt.s32.totalorder %s19, 1
      %s513 = scalar_select %p512, %s19, 1
      %p514 = scmp.lt.s32.totalorder %s511, 15
      %s515 = scalar_select %p514, %s511, 15
      %s516 = smul.addr %s513, 16
      %s517 = sadd.s32 %s515, %s516
      %s518 = smul.addr %s517, 8
      %s519 = scalar_lea.vmem %s3, %s518
      // Predicated region
      $region33: #{_tdnn_block_impl.3} parent=31 // pred_check
        %p520 = pneg %p126
      $region34: #{_tdnn_block_impl.3} parent=31 // pred_check_branch
        %522 = sbr.rel (%p520) target = $region36
      $region35: #{_tdnn_block_impl.3} parent=31 // pred_region
        %s523 = smul.u32 16, %s18
      $region36: #{_tdnn_block_impl.3} parent=31 // pred_fallthru
        _
    $region32: #{_tdnn_block_impl.3} parent=5 // pred_fallthru
      _
    %p524 = scmp.le.s32.totalorder 2, %s9
    // Predicated region
    $region37: #{_tdnn_block_impl.3} parent=5 // pred_check
      %p525 = pneg %p524
    $region38: #{_tdnn_block_impl.3} parent=5 // pred_check_branch
      %527 = sbr.rel (%p525) target = $region40
    $region39: #{_tdnn_block_impl.3} parent=5 // pred_region
      %s528 = ssub.s32 %s9, 2
      // Predicated region
      $region41: #{_tdnn_block_impl.3} parent=39 // pred_check
        %p529 = pneg %p132
      $region42: #{_tdnn_block_impl.3} parent=39 // pred_check_branch
        %531 = sbr.rel (%p529) target = $region44
      $region43: #{_tdnn_block_impl.3} parent=39 // pred_region
        %s532 = smul.u32 16, %s20
        %p533 = scmp.lt.s32.totalorder %s21, 1
        %s534 = scalar_select %p533, %s21, 1
        %p535 = scmp.lt.s32.totalorder %s532, 15
        %s536 = scalar_select %p535, %s532, 15
        %s537 = smul.addr %s534, 16
        %s538 = sadd.s32 %s536, %s537
        %s539 = smul.addr %s538, 8
        %s540 = scalar_lea.vmem %s3, %s539
      $region44: #{_tdnn_block_impl.3} parent=39 // pred_fallthru
        _
    $region40: #{_tdnn_block_impl.3} parent=5 // pred_fallthru
      _
  $region6: #{_tdnn_block_impl.3} parent=0 // loop_footer
    %s13 = sadd.s32 1, %s9
  $region7: #{_tdnn_block_impl.3} parent=0 // loop_footer_branch
    %8 = sbr.rel target = $region3
  $region8: #{_tdnn_block_impl.3} parent=0 // loop_exit
    _

// kernel: _tdnn_block_impl.2
$region0: #{_tdnn_block_impl.2}
  #allocation0 [shape = 'u32[]', space=smem, size = 0x4, offset = 0x4, fixed_abs, tag = 'smem constant byte address 0x4 - core index']
  #allocation1 [shape = 'u32[144,128]{1,0:T(1,128)}', space=vmem, size = 0x12000, scoped, tag = 'internal scratch']
  #allocation2 [shape = 'f32[25,128]{1,0:T(8,128)}', space=vmem, size = 0x4000, scoped, tag = 'scratch operand']
  %s0 = inlined_call_operand.vmem [shape: f32[2,16,128], index: 0, kind: input, shape index: {}]
  %s1 = inlined_call_operand.vmem [shape: f32[384,128], index: 1, kind: input, shape index: {}]
  %s2 = inlined_call_operand.vmem [shape: f32[1,128], index: 2, kind: input, shape index: {}]
  %s3 = inlined_call_operand.vmem [shape: f32[2,128,16], index: 3, kind: output, shape index: {0}]
  %s4 = inlined_call_operand.vmem [shape: f32[2,2,128], index: 4, kind: output, shape index: {1}]
  %5 = xla_tuple %s3, %s4
  %s6 = sld [smem:[#allocation0]]
  $region53: #{_tdnn_block_impl.2} parent=0
    _
  %s8 = ssub.s32 1, %s6
  %s9 = scalar_select 0, %s8, %s6
  loop: start=0, step=1, limit=4
  $region2: #{_tdnn_block_impl.2} parent=0 // loop_pre_header
    _
  $region3: #{_tdnn_block_impl.2} parent=0 // loop_header
    %s11 = sphi 0, %s15
    %p12 = scmp.ge.s32.totalorder %s11, 4
    %s18 = sphi 0, %s30
    %s19 = sphi 0, %s26
    %s20 = sphi 0, %s18
    %s21 = sphi 0, %s19
    %s22 = sphi 0, %s20
    %s23 = sphi 0, %s21
    %s33 = sphi 0, %s35
    %s36 = sphi 0, %s33
    %s37 = sphi 0, %s36
    %s53 = sphi 0, %s37
    %s59 = sphi 0, %s61
    %s62 = sphi 0, %s59
    %s63 = sphi 0, %s62
    %s79 = sphi 0, %s63
    %s85 = sphi 0, %s87
    %s88 = sphi 0, %s85
    %s89 = sphi 0, %s88
    %s105 = sphi 0, %s89
    %s113 = sphi 0, %s115
    %s116 = sphi 0, %s113
    %s117 = sphi 0, %s116
    %s133 = sphi 0, %s117
    %s141 = sphi 0, %s143
    %s144 = sphi 0, %s141
    %s145 = sphi 0, %s144
    %s161 = sphi 0, %s145
  $region4: #{_tdnn_block_impl.2} parent=0 // loop_header_branch
    %14 = sbr.rel (%p12) target = $region8
  $region5: #{_tdnn_block_impl.2} parent=0 // loop_body
    %s16 = ssub.s32 %s11, 1
    %s17 = ssub.s32 %s11, 2
    %s24 = sadd.s32 1, %s19
    %p25 = scmp.ge.s32.totalorder %s24, 2
    %s26 = scalar_select %p25, 0, %s24
    %s27 = sadd.s32 1, %s18
    %s28 = scalar_select %p25, %s27, %s18
    %p29 = scmp.ge.s32.totalorder %s28, 1
    %s30 = scalar_select %p29, 0, %s28
    %s31 = ssub.s32 %s19, %s26
    %p32 = scmp.eq.s32.totalorder %s31, 0
    %s34 = sadd.s32 %s33, 1
    %s35 = scalar_select %p32, %s33, %s34
    %p38 = pneg %p32
    %p39 = scmp.eq.s32.totalorder %s11, 1
    %p40 = por %p38, %p39
    %p41 = scmp.ne.s32.totalorder %s33, %s36
    %p42 = scmp.eq.s32.totalorder %s11, 0
    %p43 = por %p41, %p42
    %p44 = scmp.ne.s32.totalorder %s33, %s36
    %p45 = scmp.eq.s32.totalorder %s16, 1
    %p46 = por %p44, %p45
    %p47 = scmp.ne.s32.totalorder %s36, %s37
    %p48 = scmp.eq.s32.totalorder %s16, 0
    %p49 = por %p47, %p48
    %p50 = scmp.ne.s32.totalorder %s36, %s37
    %p51 = scmp.eq.s32.totalorder %s17, 1
    %p52 = por %p50, %p51
    %p54 = scmp.ne.s32.totalorder %s37, %s53
    %p55 = scmp.eq.s32.totalorder %s17, 0
    %p56 = por %p54, %p55
    %s57 = ssub.s32 %s18, %s30
    %p58 = scmp.eq.s32.totalorder %s57, 0
    %s60 = sadd.s32 %s59, 1
    %s61 = scalar_select %p58, %s59, %s60
    %p64 = pneg %p58
    %p65 = scmp.eq.s32.totalorder %s11, 1
    %p66 = por %p64, %p65
    %p67 = scmp.ne.s32.totalorder %s59, %s62
    %p68 = scmp.eq.s32.totalorder %s11, 0
    %p69 = por %p67, %p68
    %p70 = scmp.ne.s32.totalorder %s59, %s62
    %p71 = scmp.eq.s32.totalorder %s16, 1
    %p72 = por %p70, %p71
    %p73 = scmp.ne.s32.totalorder %s62, %s63
    %p74 = scmp.eq.s32.totalorder %s16, 0
    %p75 = por %p73, %p74
    %p76 = scmp.ne.s32.totalorder %s62, %s63
    %p77 = scmp.eq.s32.totalorder %s17, 1
    %p78 = por %p76, %p77
    %p80 = scmp.ne.s32.totalorder %s63, %s79
    %p81 = scmp.eq.s32.totalorder %s17, 0
    %p82 = por %p80, %p81
    %s83 = ssub.s32 %s18, %s30
    %p84 = scmp.eq.s32.totalorder %s83, 0
    %s86 = sadd.s32 %s85, 1
    %s87 = scalar_select %p84, %s85, %s86
    %p90 = pneg %p84
    %p91 = scmp.eq.s32.totalorder %s11, 1
    %p92 = por %p90, %p91
    %p93 = scmp.ne.s32.totalorder %s85, %s88
    %p94 = scmp.eq.s32.totalorder %s11, 0
    %p95 = por %p93, %p94
    %p96 = scmp.ne.s32.totalorder %s85, %s88
    %p97 = scmp.eq.s32.totalorder %s16, 1
    %p98 = por %p96, %p97
    %p99 = scmp.ne.s32.totalorder %s88, %s89
    %p100 = scmp.eq.s32.totalorder %s16, 0
    %p101 = por %p99, %p100
    %p102 = scmp.ne.s32.totalorder %s88, %s89
    %p103 = scmp.eq.s32.totalorder %s17, 1
    %p104 = por %p102, %p103
    %p106 = scmp.ne.s32.totalorder %s89, %s105
    %p107 = scmp.eq.s32.totalorder %s17, 0
    %p108 = por %p106, %p107
    %s109 = ssub.s32 %s19, %s26
    %s110 = ssub.s32 %s18, %s30
    %s111 = sor.u32 %s109, %s110
    %p112 = scmp.eq.s32.totalorder %s111, 0
    %s114 = sadd.s32 %s113, 1
    %s115 = scalar_select %p112, %s113, %s114
    %p118 = pneg %p112
    %p119 = scmp.eq.s32.totalorder %s11, 1
    %p120 = por %p118, %p119
    %p121 = scmp.ne.s32.totalorder %s113, %s116
    %p122 = scmp.eq.s32.totalorder %s11, 0
    %p123 = por %p121, %p122
    %p124 = scmp.ne.s32.totalorder %s113, %s116
    %p125 = scmp.eq.s32.totalorder %s16, 1
    %p126 = por %p124, %p125
    %p127 = scmp.ne.s32.totalorder %s116, %s117
    %p128 = scmp.eq.s32.totalorder %s16, 0
    %p129 = por %p127, %p128
    %p130 = scmp.ne.s32.totalorder %s116, %s117
    %p131 = scmp.eq.s32.totalorder %s17, 1
    %p132 = por %p130, %p131
    %p134 = scmp.ne.s32.totalorder %s117, %s133
    %p135 = scmp.eq.s32.totalorder %s17, 0
    %p136 = por %p134, %p135
    %s137 = ssub.s32 %s19, %s26
    %s138 = ssub.s32 %s18, %s30
    %s139 = sor.u32 %s137, %s138
    %p140 = scmp.eq.s32.totalorder %s139, 0
    %s142 = sadd.s32 %s141, 1
    %s143 = scalar_select %p140, %s141, %s142
    %p146 = pneg %p140
    %p147 = scmp.eq.s32.totalorder %s11, 1
    %p148 = por %p146, %p147
    %p149 = scmp.ne.s32.totalorder %s141, %s144
    %p150 = scmp.eq.s32.totalorder %s11, 0
    %p151 = por %p149, %p150
    %p152 = scmp.ne.s32.totalorder %s141, %s144
    %p153 = scmp.eq.s32.totalorder %s16, 1
    %p154 = por %p152, %p153
    %p155 = scmp.ne.s32.totalorder %s144, %s145
    %p156 = scmp.eq.s32.totalorder %s16, 0
    %p157 = por %p155, %p156
    %p158 = scmp.ne.s32.totalorder %s144, %s145
    %p159 = scmp.eq.s32.totalorder %s17, 1
    %p160 = por %p158, %p159
    %p162 = scmp.ne.s32.totalorder %s145, %s161
    %p163 = scmp.eq.s32.totalorder %s17, 0
    %p164 = por %p162, %p163
    %p165 = scmp.le.s32.totalorder 1, %s11
    %p166 = scmp.lt.s32.totalorder %s11, 3
    %p167 = pnand %p165, %p166
    %p168 = pneg %p167
    // Predicated region
    $region9: #{_tdnn_block_impl.2} parent=5 // pred_check
      _
    $region10: #{_tdnn_block_impl.2} parent=5 // pred_check_branch
      %170 = sbr.rel (%p167) target = $region12
    $region11: #{_tdnn_block_impl.2} parent=5 // pred_region
      %s171 = ssub.s32 %s11, 1
      // Predicated region
      $region13: #{_tdnn_block_impl.2} parent=11 // pred_check
        %p172 = pneg %p75
      $region14: #{_tdnn_block_impl.2} parent=11 // pred_check_branch
        %174 = sbr.rel (%p172) target = $region16
      $region15: #{_tdnn_block_impl.2} parent=11 // pred_region
        %p175 = scmp.lt.s32.totalorder %s20, 0
        %s176 = scalar_select %p175, %s20, 0
        %s177 = smul.addr %s176, 8
        %s178 = scalar_lea.vmem %s1, %s177
      $region16: #{_tdnn_block_impl.2} parent=11 // pred_fallthru
        _
      // Predicated region
      $region17: #{_tdnn_block_impl.2} parent=11 // pred_check
        %p179 = pneg %p101
      $region18: #{_tdnn_block_impl.2} parent=11 // pred_check_branch
        %181 = sbr.rel (%p179) target = $region20
      $region19: #{_tdnn_block_impl.2} parent=11 // pred_region
        %p182 = scmp.lt.s32.totalorder %s20, 0
        %s183 = scalar_select %p182, %s20, 0
        %s184 = scalar_lea.vmem %s2, %s183
      $region20: #{_tdnn_block_impl.2} parent=11 // pred_fallthru
        _
    $region12: #{_tdnn_block_impl.2} parent=5 // pred_fallthru
      _
    %p185 = scmp.lt.s32.totalorder %s11, 2
    // Predicated region
    $region21: #{_tdnn_block_impl.2} parent=5 // pred_check
      %p186 = pneg %p185
    $region22: #{_tdnn_block_impl.2} parent=5 // pred_check_branch
      %188 = sbr.rel (%p186) target = $region24
    $region23: #{_tdnn_block_impl.2} parent=5 // pred_region
      // Predicated region
      $region25: #{_tdnn_block_impl.2} parent=23 // pred_check
        %p189 = pneg %p43
      $region26: #{_tdnn_block_impl.2} parent=23 // pred_check_branch
        %191 = sbr.rel (%p189) target = $region28
      $region27: #{_tdnn_block_impl.2} parent=23 // pred_region
        %p192 = scmp.lt.s32.totalorder %s19, 1
        %s193 = scalar_select %p192, %s19, 1
        %s194 = smul.addr %s193, 2
        %s195 = smul.addr %s194, 8
        %s196 = scalar_lea.vmem %s0, %s195
      $region28: #{_tdnn_block_impl.2} parent=23 // pred_fallthru
        _
    $region24: #{_tdnn_block_impl.2} parent=5 // pred_fallthru
      _
    %p197 = scmp.le.s32.totalorder 1, %s11
    %p198 = scmp.lt.s32.totalorder %s11, 3
    %p199 = pnand %p197, %p198
    %p200 = pneg %p199
    // Predicated region
    $region29: #{_tdnn_block_impl.2} parent=5 // pred_check
      _
    $region30: #{_tdnn_block_impl.2} parent=5 // pred_check_branch
      %202 = sbr.rel (%p199) target = $region32
    $region31: #{_tdnn_block_impl.2} parent=5 // pred_region
      %s203 = ssub.s32 %s11, 1
      %p204 = scmp.lt.s32.totalorder %s21, 1
      %s205 = scalar_select %p204, %s21, 1
      %s206 = smul.addr %s205, 2
      %s207 = smul.addr %s206, 8
      %s208 = scalar_lea.vmem %s0, %s207
      %p209 = pneg %p49
      %p210 = pneg %p46
      %p211 = scmp.lt.s32.totalorder %s20, 0
      %s212 = scalar_select %p211, %s20, 0
      %s213 = smul.addr %s212, 8
      %s214 = scalar_lea.vmem %s1, %s213
      %p215 = pneg %p75
      %p216 = pneg %p72
      %p217 = scmp.lt.s32.totalorder %s20, 0
      %s218 = scalar_select %p217, %s20, 0
      %s219 = scalar_lea.vmem %s2, %s218
      %p220 = pneg %p101
      %p221 = pneg %p98
      %p222 = pneg %p129
      %p223 = pneg %p126
      %s224 = smul.u32 16, %s20
      %p225 = scmp.lt.s32.totalorder %s21, 1
      %s226 = scalar_select %p225, %s21, 1
      %p227 = scmp.lt.s32.totalorder %s224, 15
      %s228 = scalar_select %p227, %s224, 15
      %s229 = smul.addr %s226, 16
      %s230 = sadd.s32 %s228, %s229
      %s231 = smul.addr %s230, 8
      %s232 = scalar_lea.vmem %s3, %s231
      %p233 = pneg %p157
      %p234 = pneg %p154
      %p235 = scmp.lt.s32.totalorder %s21, 1
      %s236 = scalar_select %p235, %s21, 1
      %p237 = scmp.lt.s32.totalorder %s20, 0
      %s238 = scalar_select %p237, %s20, 0
      %s239 = sadd.s32 %s238, %s236
      %s240 = smul.addr %s239, 2
      %s241 = scalar_lea.vmem %s4, %s240
      %p242 = scmp.lt.s32.totalorder %s21, 1
      %s243 = scalar_select %p242, %s21, 1
      %s244 = smul.addr %s243, 2
      %s245 = smul.addr %s244, 8
      %s246 = scalar_lea.vmem %s0, %s245
      %p247 = scmp.lt.s32.totalorder %s20, 0
      %s248 = scalar_select %p247, %s20, 0
      %s249 = smul.addr %s248, 8
      %s250 = scalar_lea.vmem %s1, %s249
      %p251 = scmp.lt.s32.totalorder %s20, 0
      %s252 = scalar_select %p251, %s20, 0
      %s253 = scalar_lea.vmem %s2, %s252
      %s254 = smul.u32 16, %s20
      %p255 = scmp.lt.s32.totalorder %s21, 1
      %s256 = scalar_select %p255, %s21, 1
      %p257 = scmp.lt.s32.totalorder %s254, 15
      %s258 = scalar_select %p257, %s254, 15
      %s259 = smul.addr %s256, 16
      %s260 = sadd.s32 %s258, %s259
      %s261 = smul.addr %s260, 8
      %s262 = scalar_lea.vmem %s3, %s261
      %s263 = smul.u32 16, %s20
      %p264 = scmp.lt.s32.totalorder %s21, 1
      %s265 = scalar_select %p264, %s21, 1
      %p266 = scmp.lt.s32.totalorder %s20, 0
      %s267 = scalar_select %p266, %s20, 0
      %s268 = sadd.s32 %s267, %s265
      %s269 = smul.addr %s268, 2
      %s270 = scalar_lea.vmem %s4, %s269
      %v271 = vld [vmem:[%s246] sm:$0xff]
      %v272 = vld [vmem:[%s246 + $0x8] sm:$0xff]
      %273 = vst [vmem:[#allocation2 + $0x8] sm:$0xff] %v271
      %274 = vst [vmem:[#allocation2 + $0x10] sm:$0xff] %v272
      %v275 = vld [vmem:[%s246 + $0x1] sm:$0x1]
      %276 = vst [vmem:[#allocation2 + $0x7] sm:$0x1] %v275
      %v277 = vld [vmem:[%s246 + $0xe] sm:$0x1]
      %278 = vst [vmem:[#allocation2 + $0x18] sm:$0x1] %v277
      %v279 = vld [vmem:[#allocation2 + $0x7] sm:$0xff]
      %v280 = vld [vmem:[#allocation2 + $0xf] sm:$0xff]
      %v281 = vld [vmem:[#allocation2 + $0x8] sm:$0xff]
      %v282 = vld [vmem:[#allocation2 + $0x10] sm:$0xff]
      %v283 = vld [vmem:[#allocation2 + $0x9] sm:$0xff]
      %v284 = vld [vmem:[#allocation2 + $0x11] sm:$0xff]
      %v285 = vld [vmem:[%s250] sm:$0xff]
      %v286 = vld [vmem:[%s250 + $0x8] sm:$0xff]
      %v287 = vld [vmem:[%s250 + $0x10] sm:$0xff]
      %v288 = vld [vmem:[%s250 + $0x18] sm:$0xff]
      %v289 = vld [vmem:[%s250 + $0x20] sm:$0xff]
      %v290 = vld [vmem:[%s250 + $0x28] sm:$0xff]
      %v291 = vld [vmem:[%s250 + $0x30] sm:$0xff]
      %v292 = vld [vmem:[%s250 + $0x38] sm:$0xff]
      %v293 = vld [vmem:[%s250 + $0x40] sm:$0xff]
      %v294 = vld [vmem:[%s250 + $0x48] sm:$0xff]
      %v295 = vld [vmem:[%s250 + $0x50] sm:$0xff]
      %v296 = vld [vmem:[%s250 + $0x58] sm:$0xff]
      %v297 = vld [vmem:[%s250 + $0x60] sm:$0xff]
      %v298 = vld [vmem:[%s250 + $0x68] sm:$0xff]
      %v299 = vld [vmem:[%s250 + $0x70] sm:$0xff]
      %v300 = vld [vmem:[%s250 + $0x78] sm:$0xff]
      %v301 = vld [vmem:[%s250 + $0x80] sm:$0xff]
      %v302 = vld [vmem:[%s250 + $0x88] sm:$0xff]
      %v303 = vld [vmem:[%s250 + $0x90] sm:$0xff]
      %v304 = vld [vmem:[%s250 + $0x98] sm:$0xff]
      %v305 = vld [vmem:[%s250 + $0xa0] sm:$0xff]
      %v306 = vld [vmem:[%s250 + $0xa8] sm:$0xff]
      %v307 = vld [vmem:[%s250 + $0xb0] sm:$0xff]
      %v308 = vld [vmem:[%s250 + $0xb8] sm:$0xff]
      %v309 = vld [vmem:[%s250 + $0xc0] sm:$0xff]
      %v310 = vld [vmem:[%s250 + $0xc8] sm:$0xff]
      %v311 = vld [vmem:[%s250 + $0xd0] sm:$0xff]
      %v312 = vld [vmem:[%s250 + $0xd8] sm:$0xff]
      %v313 = vld [vmem:[%s250 + $0xe0] sm:$0xff]
      %v314 = vld [vmem:[%s250 + $0xe8] sm:$0xff]
      %v315 = vld [vmem:[%s250 + $0xf0] sm:$0xff]
      %v316 = vld [vmem:[%s250 + $0xf8] sm:$0xff]
      %v317 = vld [vmem:[%s250 + $0x100] sm:$0xff]
      %v318 = vld [vmem:[%s250 + $0x108] sm:$0xff]
      %v319 = vld [vmem:[%s250 + $0x110] sm:$0xff]
      %v320 = vld [vmem:[%s250 + $0x118] sm:$0xff]
      %v321 = vld [vmem:[%s250 + $0x120] sm:$0xff]
      %v322 = vld [vmem:[%s250 + $0x128] sm:$0xff]
      %v323 = vld [vmem:[%s250 + $0x130] sm:$0xff]
      %v324 = vld [vmem:[%s250 + $0x138] sm:$0xff]
      %v325 = vld [vmem:[%s250 + $0x140] sm:$0xff]
      %v326 = vld [vmem:[%s250 + $0x148] sm:$0xff]
      %v327 = vld [vmem:[%s250 + $0x150] sm:$0xff]
      %v328 = vld [vmem:[%s250 + $0x158] sm:$0xff]
      %v329 = vld [vmem:[%s250 + $0x160] sm:$0xff]
      %v330 = vld [vmem:[%s250 + $0x168] sm:$0xff]
      %v331 = vld [vmem:[%s250 + $0x170] sm:$0xff]
      %v332 = vld [vmem:[%s250 + $0x178] sm:$0xff]
      %v333 = vld [vmem:[%s253] sm:$0x1]
      %v335 = vlaneseq
      %v336 = vshrl.u32 %v335, 7
      %v337 = vsub.s32 0, %v336
      %v338 = vrot.slane %v333, %v337
      %340 = vmatprep.subr.mxu0 0.0
      %341 = vmatpush1.msra.mxu0 %v285
      %342 = vmatprep.subr.mxu0 0.0
      %343 = vmatpush1.msra.mxu0 %v286
      %344 = vmatprep.subr.mxu0 0.0
      %345 = vmatpush1.msra.mxu0 %v287
      %346 = vmatprep.subr.mxu0 0.0
      %347 = vmatpush1.msra.mxu0 %v288
      %348 = vmatprep.subr.mxu0 0.0
      %349 = vmatpush1.msra.mxu0 %v289
      %350 = vmatprep.subr.mxu0 0.0
      %351 = vmatpush1.msra.mxu0 %v290
      %352 = vmatprep.subr.mxu0 0.0
      %353 = vmatpush1.msra.mxu0 %v291
      %354 = vmatprep.subr.mxu0 0.0
      %355 = vmatpush1.msra.mxu0 %v292
      %356 = vmatprep.subr.mxu0 0.0
      %357 = vmatpush1.msra.mxu0 %v293
      %358 = vmatprep.subr.mxu0 0.0
      %359 = vmatpush1.msra.mxu0 %v294
      %360 = vmatprep.subr.mxu0 0.0
      %361 = vmatpush1.msra.mxu0 %v295
      %362 = vmatprep.subr.mxu0 0.0
      %363 = vmatpush1.msra.mxu0 %v296
      %364 = vmatprep.subr.mxu0 0.0
      %365 = vmatpush1.msra.mxu0 %v297
      %366 = vmatprep.subr.mxu0 0.0
      %367 = vmatpush1.msra.mxu0 %v298
      %368 = vmatprep.subr.mxu0 0.0
      %369 = vmatpush1.msra.mxu0 %v299
      %370 = vmatprep.subr.mxu0 0.0
      %371 = vmatpush1.msra.mxu0 %v300
      %372 = vmatprep.subr.mxu0 0.0
      %373 = vmatpush1.msra.mxu0 %v301
      %374 = vmatprep.subr.mxu0 0.0
      %375 = vmatpush1.msra.mxu0 %v302
      %376 = vmatprep.subr.mxu0 0.0
      %377 = vmatpush1.msra.mxu0 %v303
      %378 = vmatprep.subr.mxu0 0.0
      %379 = vmatpush1.msra.mxu0 %v304
      %380 = vmatprep.subr.mxu0 0.0
      %381 = vmatpush1.msra.mxu0 %v305
      %382 = vmatprep.subr.mxu0 0.0
      %383 = vmatpush1.msra.mxu0 %v306
      %384 = vmatprep.subr.mxu0 0.0
      %385 = vmatpush1.msra.mxu0 %v307
      %386 = vmatprep.subr.mxu0 0.0
      %387 = vmatpush1.msra.mxu0 %v308
      %388 = vmatprep.subr.mxu0 0.0
      %389 = vmatpush1.msra.mxu0 %v309
      %390 = vmatprep.subr.mxu0 0.0
      %391 = vmatpush1.msra.mxu0 %v310
      %392 = vmatprep.subr.mxu0 0.0
      %393 = vmatpush1.msra.mxu0 %v311
      %394 = vmatprep.subr.mxu0 0.0
      %395 = vmatpush1.msra.mxu0 %v312
      %396 = vmatprep.subr.mxu0 0.0
      %397 = vmatpush1.msra.mxu0 %v313
      %398 = vmatprep.subr.mxu0 0.0
      %399 = vmatpush1.msra.mxu0 %v314
      %400 = vmatprep.subr.mxu0 0.0
      %401 = vmatpush1.msra.mxu0 %v315
      %402 = vmatprep.subr.mxu0 0.0
      %403 = vmatpush1.msra.mxu0 %v316
      %404 = vmatprep.mubr.f32.mxu0 %v281
      %405 = vmatmul.mubr.f32.gmra.mrb[0].mxu0 %v279
      %v406 = vpop.f32.mrb[0].mxu0
      %v407 = vadd.f32 %v338, %v406
      %v408 = vpop.f32.mrb[0].mxu0
      %409 = vmatprep.mubr.f32.mxu0 %v282
      %410 = vmatmul.mubr.f32.gmra.mrb[0].mxu0 %v280
      %v411 = vpop.f32.mrb[0].mxu0
      %v412 = vadd.f32 %v338, %v411
      %v413 = vpop.f32.mrb[0].mxu0
      %414 = vdwg.mxu0
      %415 = vmatprep.subr.mxu0 0.0
      %416 = vmatpush1.msra.mxu0 %v317
      %417 = vmatprep.subr.mxu0 0.0
      %418 = vmatpush1.msra.mxu0 %v318
      %419 = vmatprep.subr.mxu0 0.0
      %420 = vmatpush1.msra.mxu0 %v319
      %421 = vmatprep.subr.mxu0 0.0
      %422 = vmatpush1.msra.mxu0 %v320
      %423 = vmatprep.subr.mxu0 0.0
      %424 = vmatpush1.msra.mxu0 %v321
      %425 = vmatprep.subr.mxu0 0.0
      %426 = vmatpush1.msra.mxu0 %v322
      %427 = vmatprep.subr.mxu0 0.0
      %428 = vmatpush1.msra.mxu0 %v323
      %429 = vmatprep.subr.mxu0 0.0
      %430 = vmatpush1.msra.mxu0 %v324
      %431 = vmatprep.subr.mxu0 0.0
      %432 = vmatpush1.msra.mxu0 %v325
      %433 = vmatprep.subr.mxu0 0.0
      %434 = vmatpush1.msra.mxu0 %v326
      %435 = vmatprep.subr.mxu0 0.0
      %436 = vmatpush1.msra.mxu0 %v327
      %437 = vmatprep.subr.mxu0 0.0
      %438 = vmatpush1.msra.mxu0 %v328
      %439 = vmatprep.subr.mxu0 0.0
      %440 = vmatpush1.msra.mxu0 %v329
      %441 = vmatprep.subr.mxu0 0.0
      %442 = vmatpush1.msra.mxu0 %v330
      %443 = vmatprep.subr.mxu0 0.0
      %444 = vmatpush1.msra.mxu0 %v331
      %445 = vmatprep.subr.mxu0 0.0
      %446 = vmatpush1.msra.mxu0 %v332
      %447 = vmatprep.subr.mxu0 0.0
      %448 = vmatpush1.msra.mxu0 0.0
      %449 = vmatprep.subr.mxu0 0.0
      %450 = vmatpush1.msra.mxu0 0.0
      %451 = vmatprep.subr.mxu0 0.0
      %452 = vmatpush1.msra.mxu0 0.0
      %453 = vmatprep.subr.mxu0 0.0
      %454 = vmatpush1.msra.mxu0 0.0
      %455 = vmatprep.subr.mxu0 0.0
      %456 = vmatpush1.msra.mxu0 0.0
      %457 = vmatprep.subr.mxu0 0.0
      %458 = vmatpush1.msra.mxu0 0.0
      %459 = vmatprep.subr.mxu0 0.0
      %460 = vmatpush1.msra.mxu0 0.0
      %461 = vmatprep.subr.mxu0 0.0
      %462 = vmatpush1.msra.mxu0 0.0
      %463 = vmatprep.subr.mxu0 0.0
      %464 = vmatpush1.msra.mxu0 0.0
      %465 = vmatprep.subr.mxu0 0.0
      %466 = vmatpush1.msra.mxu0 0.0
      %467 = vmatprep.subr.mxu0 0.0
      %468 = vmatpush1.msra.mxu0 0.0
      %469 = vmatprep.subr.mxu0 0.0
      %470 = vmatpush1.msra.mxu0 0.0
      %471 = vmatprep.subr.mxu0 0.0
      %472 = vmatpush1.msra.mxu0 0.0
      %473 = vmatprep.subr.mxu0 0.0
      %474 = vmatpush1.msra.mxu0 0.0
      %475 = vmatprep.subr.mxu0 0.0
      %476 = vmatpush1.msra.mxu0 0.0
      %477 = vmatprep.subr.mxu0 0.0
      %478 = vmatpush1.msra.mxu0 0.0
      %479 = vmatprep.mubr.f32.mxu0 0.0
      %480 = vmatmul.mubr.f32.gmra.mrb[0].mxu0 %v283
      %v481 = vpop.f32.mrb[0].mxu0
      %v482 = vadd.f32 %v407, %v481
      %v483 = vpop.f32.mrb[0].mxu0
      %484 = vmatprep.mubr.f32.mxu0 0.0
      %485 = vmatmul.mubr.f32.gmra.mrb[0].mxu0 %v284
      %v486 = vpop.f32.mrb[0].mxu0
      %v487 = vadd.f32 %v412, %v486
      %v488 = vpop.f32.mrb[0].mxu0
      %489 = vdwg.mxu0
      %v490 = vmax.f32 %v482, 0.0
      %v491 = vmax.f32 %v487, 0.0
      %v492 = vadd.f32 %v490, %v491
      %v493 = vrot.slane %v492, 4
      %v494 = vadd.f32 %v492, %v493
      %v495 = vrot.slane %v494, 2
      %v496 = vadd.f32 %v494, %v495
      %v497 = vrot.slane %v496, 1
      %v498 = vadd.f32 %v496, %v497
      %v499 = vmul.f32 %v490, %v490
      %v500 = vmul.f32 %v491, %v491
      %v501 = vadd.f32 %v499, %v500
      %v502 = vrot.slane %v501, 4
      %v503 = vadd.f32 %v501, %v502
      %v504 = vrot.slane %v503, 2
      %v505 = vadd.f32 %v503, %v504
      %v506 = vrot.slane %v505, 1
      %v507 = vadd.f32 %v505, %v506
      %vm508 = vcmask 1040384
      %v509 = vsel %vm508, %v498, %v507
      %510 = vst [vmem:[%s270] sm:$0x3] %v509
      %511 = vxpose.xlu0.b32.start [1/16] %v490, 128
      %512 = vxpose.xlu0.b32.cont [2/16] %v491, 128
      %513 = vxpose.xlu0.b32.cont [3/16] 0.0, 128
      %514 = vxpose.xlu0.b32.cont [4/16] 0.0, 128
      %515 = vxpose.xlu0.b32.cont [5/16] 0.0, 128
      %516 = vxpose.xlu0.b32.cont [6/16] 0.0, 128
      %517 = vxpose.xlu0.b32.cont [7/16] 0.0, 128
      %518 = vxpose.xlu0.b32.cont [8/16] 0.0, 128
      %519 = vxpose.xlu0.b32.cont [9/16] 0.0, 128
      %520 = vxpose.xlu0.b32.cont [10/16] 0.0, 128
      %521 = vxpose.xlu0.b32.cont [11/16] 0.0, 128
      %522 = vxpose.xlu0.b32.cont [12/16] 0.0, 128
      %523 = vxpose.xlu0.b32.cont [13/16] 0.0, 128
      %524 = vxpose.xlu0.b32.cont [14/16] 0.0, 128
      %525 = vxpose.xlu0.b32.cont [15/16] 0.0, 128
      %526 = vxpose.xlu0.b32.end [16/16] 0.0, 128
      %v527 = vpop.trf.xlu0
      %v528 = vpop.trf.xlu0
      %v529 = vpop.trf.xlu0
      %v530 = vpop.trf.xlu0
      %v531 = vpop.trf.xlu0
      %v532 = vpop.trf.xlu0
      %v533 = vpop.trf.xlu0
      %v534 = vpop.trf.xlu0
      %v535 = vpop.trf.xlu0
      %v536 = vpop.trf.xlu0
      %v537 = vpop.trf.xlu0
      %v538 = vpop.trf.xlu0
      %v539 = vpop.trf.xlu0
      %v540 = vpop.trf.xlu0
      %v541 = vpop.trf.xlu0
      %v542 = vpop.trf.xlu0
      %vm543 = vcmask 130048
      %544 = vst.msk [vmem:[%s262] sm:$0xff] %vm543, %v527
      %545 = vst.msk [vmem:[%s262 + $0x8] sm:$0xff] %vm543, %v528
      %546 = vst.msk [vmem:[%s262 + $0x10] sm:$0xff] %vm543, %v529
      %547 = vst.msk [vmem:[%s262 + $0x18] sm:$0xff] %vm543, %v530
      %548 = vst.msk [vmem:[%s262 + $0x20] sm:$0xff] %vm543, %v531
      %549 = vst.msk [vmem:[%s262 + $0x28] sm:$0xff] %vm543, %v532
      %550 = vst.msk [vmem:[%s262 + $0x30] sm:$0xff] %vm543, %v533
      %551 = vst.msk [vmem:[%s262 + $0x38] sm:$0xff] %vm543, %v534
      %552 = vst.msk [vmem:[%s262 + $0x40] sm:$0xff] %vm543, %v535
      %553 = vst.msk [vmem:[%s262 + $0x48] sm:$0xff] %vm543, %v536
      %554 = vst.msk [vmem:[%s262 + $0x50] sm:$0xff] %vm543, %v537
      %555 = vst.msk [vmem:[%s262 + $0x58] sm:$0xff] %vm543, %v538
      %556 = vst.msk [vmem:[%s262 + $0x60] sm:$0xff] %vm543, %v539
      %557 = vst.msk [vmem:[%s262 + $0x68] sm:$0xff] %vm543, %v540
      %558 = vst.msk [vmem:[%s262 + $0x70] sm:$0xff] %vm543, %v541
      %559 = vst.msk [vmem:[%s262 + $0x78] sm:$0xff] %vm543, %v542
      %s560 = smul.u32 16, %s20
      %p561 = scmp.lt.s32.totalorder %s21, 1
      %s562 = scalar_select %p561, %s21, 1
      %p563 = scmp.lt.s32.totalorder %s560, 15
      %s564 = scalar_select %p563, %s560, 15
      %s565 = smul.addr %s562, 16
      %s566 = sadd.s32 %s564, %s565
      %s567 = smul.addr %s566, 8
      %s568 = scalar_lea.vmem %s3, %s567
      %p569 = scmp.lt.s32.totalorder %s21, 1
      %s570 = scalar_select %p569, %s21, 1
      %p571 = scmp.lt.s32.totalorder %s20, 0
      %s572 = scalar_select %p571, %s20, 0
      %s573 = sadd.s32 %s572, %s570
      %s574 = smul.addr %s573, 2
      %s575 = scalar_lea.vmem %s4, %s574
      // Predicated region
      $region33: #{_tdnn_block_impl.2} parent=31 // pred_check
        %p576 = pneg %p126
      $region34: #{_tdnn_block_impl.2} parent=31 // pred_check_branch
        %578 = sbr.rel (%p576) target = $region36
      $region35: #{_tdnn_block_impl.2} parent=31 // pred_region
        %s579 = smul.u32 16, %s20
      $region36: #{_tdnn_block_impl.2} parent=31 // pred_fallthru
        _
      // Predicated region
      $region37: #{_tdnn_block_impl.2} parent=31 // pred_check
        %p580 = pneg %p154
      $region38: #{_tdnn_block_impl.2} parent=31 // pred_check_branch
        %582 = sbr.rel (%p580) target = $region40
      $region39: #{_tdnn_block_impl.2} parent=31 // pred_region
        _
      $region40: #{_tdnn_block_impl.2} parent=31 // pred_fallthru
        _
    $region32: #{_tdnn_block_impl.2} parent=5 // pred_fallthru
      _
    %p583 = scmp.le.s32.totalorder 2, %s11
    // Predicated region
    $region41: #{_tdnn_block_impl.2} parent=5 // pred_check
      %p584 = pneg %p583
    $region42: #{_tdnn_block_impl.2} parent=5 // pred_check_branch
      %586 = sbr.rel (%p584) target = $region44
    $region43: #{_tdnn_block_impl.2} parent=5 // pred_region
      %s587 = ssub.s32 %s11, 2
      // Predicated region
      $region45: #{_tdnn_block_impl.2} parent=43 // pred_check
        %p588 = pneg %p132
      $region46: #{_tdnn_block_impl.2} parent=43 // pred_check_branch
        %590 = sbr.rel (%p588) target = $region48
      $region47: #{_tdnn_block_impl.2} parent=43 // pred_region
        %s591 = smul.u32 16, %s22
        %p592 = scmp.lt.s32.totalorder %s23, 1
        %s593 = scalar_select %p592, %s23, 1
        %p594 = scmp.lt.s32.totalorder %s591, 15
        %s595 = scalar_select %p594, %s591, 15
        %s596 = smul.addr %s593, 16
        %s597 = sadd.s32 %s595, %s596
        %s598 = smul.addr %s597, 8
        %s599 = scalar_lea.vmem %s3, %s598
      $region48: #{_tdnn_block_impl.2} parent=43 // pred_fallthru
        _
      // Predicated region
      $region49: #{_tdnn_block_impl.2} parent=43 // pred_check
        %p600 = pneg %p160
      $region50: #{_tdnn_block_impl.2} parent=43 // pred_check_branch
        %602 = sbr.rel (%p600) target = $region52
      $region51: #{_tdnn_block_impl.2} parent=43 // pred_region
        %p603 = scmp.lt.s32.totalorder %s23, 1
        %s604 = scalar_select %p603, %s23, 1
        %p605 = scmp.lt.s32.totalorder %s22, 0
        %s606 = scalar_select %p605, %s22, 0
        %s607 = sadd.s32 %s606, %s604
        %s608 = smul.addr %s607, 2
        %s609 = scalar_lea.vmem %s4, %s608
      $region52: #{_tdnn_block_impl.2} parent=43 // pred_fallthru
        _
    $region44: #{_tdnn_block_impl.2} parent=5 // pred_fallthru
      _
  $region6: #{_tdnn_block_impl.2} parent=0 // loop_footer
    %s15 = sadd.s32 1, %s11
  $region7: #{_tdnn_block_impl.2} parent=0 // loop_footer_branch
    %10 = sbr.rel target = $region3
  $region8: #{_tdnn_block_impl.2} parent=0 // loop_exit
    _

</llo_original>
